<compile_context>
chip_gen: v7x
topology: tpu7x:2x2x1
jax: 0.10.0
libtpu: 0.0.40
codegen_flags: <defaults>
</compile_context>

<pallas_src>
import functools

import jax
import jax.numpy as jnp
from jax.experimental import pallas as pl
from jax.experimental.pallas import tpu as pltpu


def _round_up(x: int, m: int) -> int:
    return ((x + m - 1) // m) * m


def _fused_mlp_kernel(x_ref, *args, num_layers: int):
    """args = (w0, b0, w1, b1, ..., w_{L-1}, b_{L-1}, out_ref).

    x_ref: (TILE_B, D0p) bf16    w_i: (D_ip, D_{i+1}p) bf16    b_i: (1, D_{i+1}p) f32
    out_ref: (TILE_B, D_Lp) f32
    """
    out_ref = args[2 * num_layers]
    h = x_ref[...]
    for layer in range(num_layers):  # static unroll, L is tiny
        w = args[2 * layer][...]
        b = args[2 * layer + 1][...]
        y = jnp.dot(h, w, preferred_element_type=jnp.float32)  # MXU, f32 acc
        y = y + b                                              # f32 bias add
        if layer < num_layers - 1:
            y = jnp.maximum(y, 0.0)                            # ReLU in f32
            h = y.astype(w.dtype)                              # back to bf16 for next MXU pass
        else:
            out_ref[...] = y.astype(out_ref.dtype)


def init_mlp_params(key, dims):
    """nn.Linear-style init U(-1/sqrt(in), 1/sqrt(in)); W stored as (in, out) = torch W.T."""
    params = []
    for dim_in, dim_out in zip(dims[:-1], dims[1:]):
        key, kw, kb = jax.random.split(key, 3)
        bound = 1.0 / jnp.sqrt(jnp.float32(dim_in))
        w = jax.random.uniform(kw, (dim_in, dim_out), jnp.float32, -bound, bound)
        b = jax.random.uniform(kb, (dim_out,), jnp.float32, -bound, bound)
        params.append((w, b))
    return params


def make_mlp_forward(params, compute_dtype=jnp.bfloat16, tile_b_max=256):
    """Builds a jitted forward(x) that runs the whole MLP in one pallas_call."""
    n_layers = len(params)
    dims = [params[0][0].shape[0]] + [w.shape[1] for w, _ in params]
    dims_pad = [_round_up(d, 128) for d in dims]  # lane/MXU-friendly widths
    c_itemsize = jnp.dtype(compute_dtype).itemsize

    # Pad + cast weights ONCE (not per forward call). Zero padding keeps math exact.
    wb_padded = []
    for i, (w, b) in enumerate(params):
        w_p = jnp.zeros((dims_pad[i], dims_pad[i + 1]), compute_dtype)
        w_p = w_p.at[: dims[i], : dims[i + 1]].set(w.astype(compute_dtype))
        b_p = jnp.zeros((1, dims_pad[i + 1]), jnp.float32)
        b_p = b_p.at[0, : dims[i + 1]].set(b.astype(jnp.float32))
        wb_padded += [w_p, b_p]

    kernel = functools.partial(_fused_mlp_kernel, num_layers=n_layers)

    def forward(x):
        batch = x.shape[0]
        # Batch tile: multiple of 8 sublanes, capped so big batches pipeline.
        if batch <= tile_b_max:
            tile_b = _round_up(batch, 8)
        else:
            tile_b = tile_b_max
        b_pad = _round_up(batch, tile_b)

        x_p = jnp.zeros((b_pad, dims_pad[0]), compute_dtype)
        x_p = x_p.at[:batch, : dims[0]].set(x.astype(compute_dtype))

        grid = (b_pad // tile_b,)
        in_specs = [pl.BlockSpec((tile_b, dims_pad[0]), lambda i: (i, 0))]
        for li in range(n_layers):
            # Constant index_maps -> weights/biases stay VMEM-resident across the grid.
            in_specs.append(
                pl.BlockSpec((dims_pad[li], dims_pad[li + 1]), lambda i: (0, 0)))
            in_specs.append(
                pl.BlockSpec((1, dims_pad[li + 1]), lambda i: (0, 0)))
        out_spec = pl.BlockSpec((tile_b, dims_pad[-1]), lambda i: (i, 0))

        # VMEM budget: resident weights (+double-buffer headroom) + pipelined x/out
        # tiles + live intermediates. Only raise the scoped limit if we need to.
        w_bytes = sum(
            dims_pad[i] * dims_pad[i + 1] * c_itemsize + dims_pad[i + 1] * 4
            for i in range(n_layers))
        act_bytes = 2 * tile_b * dims_pad[0] * c_itemsize + 2 * tile_b * dims_pad[-1] * 4
        inter_bytes = tile_b * max(dims_pad) * 8
        est = 2 * w_bytes + act_bytes + inter_bytes + (1 << 20)
        cp_kwargs = dict(dimension_semantics=("parallel",))
        if est > 32 * 1024 * 1024:
            cp_kwargs["vmem_limit_bytes"] = int(min(est, 96 * 1024 * 1024))

        out_pad = pl.pallas_call(
            kernel,
            out_shape=jax.ShapeDtypeStruct((b_pad, dims_pad[-1]), jnp.float32),
            grid_spec=pltpu.PrefetchScalarGridSpec(
                num_scalar_prefetch=0,
                grid=grid,
                in_specs=in_specs,
                out_specs=out_spec,
            ),
            compiler_params=pltpu.CompilerParams(**cp_kwargs),
        )(x_p, *wb_padded)
        return out_pad[:batch, : dims[-1]]

    return jax.jit(forward)


if __name__ == "__main__":
    # dims = [in_dim, hidden_dim, out_dim]  ->  Linear(16,32) + ReLU + Linear(32,8)
    dims = [16, 32, 8]
    batch = 4

    key = jax.random.PRNGKey(0)
    key_x, key_p = jax.random.split(key)
    x = jax.random.normal(key_x, (batch, dims[0]), jnp.float32)
    params = init_mlp_params(key_p, dims)

    forward = make_mlp_forward(params, compute_dtype=jnp.bfloat16)
    out = jax.block_until_ready(forward(x))

    # Reference 1: same math as the kernel (bf16 matmul, f32 accumulate/bias/ReLU).
    ref = x
    for i, (w, b) in enumerate(params):
        ref = jnp.dot(ref.astype(jnp.bfloat16), w.astype(jnp.bfloat16),
                      preferred_element_type=jnp.float32) + b
        if i < len(params) - 1:
            ref = jnp.maximum(ref, 0.0)

    # Reference 2: original module semantics in full f32 (loose tolerance for bf16).
    ref32 = x
    for i, (w, b) in enumerate(params):
        ref32 = ref32 @ w + b
        if i < len(params) - 1:
            ref32 = jnp.maximum(ref32, 0.0)

    assert out.shape == (batch, dims[-1])
    assert out.dtype == jnp.float32
    assert jnp.allclose(out, ref, atol=1e-4, rtol=1e-4)
    assert jnp.allclose(out, ref32, atol=5e-2, rtol=5e-2)

    print("KERNEL_OK")
</pallas_src>

<mosaic_0001>
module attributes {stable_mosaic.version = 11 : i64} {
  func.func @_fused_mlp_kernel(%arg0: i32, %arg1: memref<8x128xbf16, #tpu.memory_space<vmem>>, %arg2: memref<128x128xbf16, #tpu.memory_space<vmem>>, %arg3: memref<1x128xf32, #tpu.memory_space<vmem>>, %arg4: memref<128x128xbf16, #tpu.memory_space<vmem>>, %arg5: memref<1x128xf32, #tpu.memory_space<vmem>>, %arg6: memref<8x128xf32, #tpu.memory_space<vmem>>) attributes {dimension_semantics = [#tpu.dimension_semantics<parallel>], iteration_bounds = array<i64: 1>, scalar_prefetch = 0 : i64, scratch_operands = 0 : i64, tpu.core_type = #tpu.core_type<tc>, window_params = [{transform_indices = @transform_0, window_bounds = array<i64: 8, 128>}, {pipeline_mode = #tpu.pipeline_mode<synchronous>, transform_indices = @transform_1, window_bounds = array<i64: 128, 128>}, {pipeline_mode = #tpu.pipeline_mode<synchronous>, transform_indices = @transform_2, window_bounds = array<i64: 1, 128>}, {pipeline_mode = #tpu.pipeline_mode<synchronous>, transform_indices = @transform_3, window_bounds = array<i64: 128, 128>}, {pipeline_mode = #tpu.pipeline_mode<synchronous>, transform_indices = @transform_4, window_bounds = array<i64: 1, 128>}, {transform_indices = @transform_5, window_bounds = array<i64: 8, 128>}]} {
    %c0 = arith.constant 0 : index
    %c0_0 = arith.constant 0 : index
    %0 = vector.load %arg1[%c0, %c0_0] : memref<8x128xbf16, #tpu.memory_space<vmem>>, vector<8x128xbf16>
    %c0_1 = arith.constant 0 : index
    %c0_2 = arith.constant 0 : index
    %1 = vector.load %arg2[%c0_1, %c0_2] : memref<128x128xbf16, #tpu.memory_space<vmem>>, vector<128x128xbf16>
    %c0_3 = arith.constant 0 : index
    %c0_4 = arith.constant 0 : index
    %2 = vector.load %arg3[%c0_3, %c0_4] : memref<1x128xf32, #tpu.memory_space<vmem>>, vector<1x128xf32>
    %cst = arith.constant dense<0.000000e+00> : vector<8x128xf32>
    %3 = tpu.matmul %0, %1, %cst {dimension_numbers = #tpu.dot_dimension_numbers<[1], [0], [0], [1], [0, 0, 1, 1], [], []>} : vector<8x128xbf16>, vector<128x128xbf16>, vector<8x128xf32> -> vector<8x128xf32>
    %4 = vector.broadcast %2 : vector<1x128xf32> to vector<8x128xf32>
    %5 = arith.addf %3, %4 : vector<8x128xf32>
    %cst_5 = arith.constant 0.000000e+00 : f32
    %6 = vector.broadcast %cst_5 : f32 to vector<8x128xf32>
    %7 = arith.maximumf %5, %6 : vector<8x128xf32>
    %8 = arith.truncf %7 : vector<8x128xf32> to vector<8x128xbf16>
    %c0_6 = arith.constant 0 : index
    %c0_7 = arith.constant 0 : index
    %9 = vector.load %arg4[%c0_6, %c0_7] : memref<128x128xbf16, #tpu.memory_space<vmem>>, vector<128x128xbf16>
    %c0_8 = arith.constant 0 : index
    %c0_9 = arith.constant 0 : index
    %10 = vector.load %arg5[%c0_8, %c0_9] : memref<1x128xf32, #tpu.memory_space<vmem>>, vector<1x128xf32>
    %cst_10 = arith.constant dense<0.000000e+00> : vector<8x128xf32>
    %11 = tpu.matmul %8, %9, %cst_10 {dimension_numbers = #tpu.dot_dimension_numbers<[1], [0], [0], [1], [0, 0, 1, 1], [], []>} : vector<8x128xbf16>, vector<128x128xbf16>, vector<8x128xf32> -> vector<8x128xf32>
    %12 = vector.broadcast %10 : vector<1x128xf32> to vector<8x128xf32>
    %13 = arith.addf %11, %12 : vector<8x128xf32>
    %c0_11 = arith.constant 0 : index
    %c0_12 = arith.constant 0 : index
    %14 = vector.load %arg6[%c0_11, %c0_12] : memref<8x128xf32, #tpu.memory_space<vmem>>, vector<8x128xf32>
    tpu.vector_store %arg6[%c0_11, %c0_12], %13 {strides = array<i32>} : memref<8x128xf32, #tpu.memory_space<vmem>>, vector<8x128xf32>,
    return
  }
  func.func @transform_0(%arg0: i32) -> (i32, i32) {
    %c0_i32 = arith.constant 0 : i32
    %c0_i32_0 = arith.constant 0 : i32
    return %arg0, %c0_i32 : i32, i32
  }
  func.func @transform_1(%arg0: i32) -> (i32, i32) {
    %c0_i32 = arith.constant 0 : i32
    %c0_i32_0 = arith.constant 0 : i32
    %c0_i32_1 = arith.constant 0 : i32
    return %c0_i32, %c0_i32_0 : i32, i32
  }
  func.func @transform_2(%arg0: i32) -> (i32, i32) {
    %c0_i32 = arith.constant 0 : i32
    %c0_i32_0 = arith.constant 0 : i32
    %c0_i32_1 = arith.constant 0 : i32
    return %c0_i32, %c0_i32_0 : i32, i32
  }
  func.func @transform_3(%arg0: i32) -> (i32, i32) {
    %c0_i32 = arith.constant 0 : i32
    %c0_i32_0 = arith.constant 0 : i32
    %c0_i32_1 = arith.constant 0 : i32
    return %c0_i32, %c0_i32_0 : i32, i32
  }
  func.func @transform_4(%arg0: i32) -> (i32, i32) {
    %c0_i32 = arith.constant 0 : i32
    %c0_i32_0 = arith.constant 0 : i32
    %c0_i32_1 = arith.constant 0 : i32
    return %c0_i32, %c0_i32_0 : i32, i32
  }
  func.func @transform_5(%arg0: i32) -> (i32, i32) {
    %c0_i32 = arith.constant 0 : i32
    %c0_i32_0 = arith.constant 0 : i32
    return %arg0, %c0_i32 : i32, i32
  }
}

</mosaic_0001>

<llo_original>
// kernel: forward.1
$region0: #{forward.1}
  #allocation0 [shape = 'u32[]', space=smem, size = 0x4, offset = 0x4, fixed_abs, tag = 'smem constant byte address 0x4 - core index']
  #allocation1 [shape = 'u32[144,128]{1,0:T(1,128)}', space=vmem, size = 0x12000, scoped, tag = 'internal scratch']
  %s0 = inlined_call_operand.vmem [shape: bf16[8,128], index: 0, kind: input, shape index: {}]
  %s1 = inlined_call_operand.hbm [shape: bf16[128,128], index: 1, kind: input, shape index: {}]
  %s2 = inlined_call_operand.vmem [shape: f32[1,128], index: 2, kind: input, shape index: {}]
  %s3 = inlined_call_operand.hbm [shape: bf16[128,128], index: 3, kind: input, shape index: {}]
  %s4 = inlined_call_operand.vmem [shape: f32[1,128], index: 4, kind: input, shape index: {}]
  %s5 = inlined_call_operand.vmem [shape: f32[8,128], index: 5, kind: output, shape index: {}]
  %s6 = sld [smem:[#allocation0]]
  $region38: #{forward.1} parent=0
    _
  %s8 = ssub.s32 1, %s6
  %s9 = scalar_select 0, %s8, %s6
  $region1: #{forward.1} parent=0
    #allocation2 [shape = 'u8[32768]{0}', space=vmem, size = 0x8000, scoped, tag = 'input window, operand 1, single buffered']
    #allocation3 [shape = 's32[1]{0}', space=sflag, size = 0x4, scoped, tag = 'scoped memory for forward.1']
    #allocation4 [shape = 'u8[32768]{0}', space=vmem, size = 0x8000, scoped, tag = 'input window, operand 3, single buffered']
    #allocation5 [shape = 's32[1]{0}', space=sflag, size = 0x4, scoped, tag = 'scoped memory for forward.1']
    %10 = vsyncpa [#allocation3], 0
    %11 = vsyncpa [#allocation5], 0
    // Predicated region
    $region2: #{forward.1} parent=1 // pred_check
      _
    $region3: #{forward.1} parent=1 // pred_check_branch
      %13 = sbr.rel (0) target = $region5
    $region4: #{forward.1} parent=1 // pred_region
      _
    $region5: #{forward.1} parent=1 // pred_fallthru
      _
    // Predicated region
    $region6: #{forward.1} parent=1 // pred_check
      _
    $region7: #{forward.1} parent=1 // pred_check_branch
      %15 = sbr.rel (0) target = $region9
    $region8: #{forward.1} parent=1 // pred_region
      %s17 = ssub.s32 1024, 1024
      %18 = vsyncadd [#allocation3], %s17
      %s19 = sshll.u32 [#allocation2], 4
      %s20 = int_to_ptr.vmem [resolvable:$true] %s19
      %25 = dma.hbm_to_vmem [thread:$0]  %s1, 1024, %s20, [#allocation3], 64, 64, 4
    $region9: #{forward.1} parent=1 // pred_fallthru
      _
    // Predicated region
    $region10: #{forward.1} parent=1 // pred_check
      _
    $region11: #{forward.1} parent=1 // pred_check_branch
      %27 = sbr.rel (0) target = $region13
    $region12: #{forward.1} parent=1 // pred_region
      _
    $region13: #{forward.1} parent=1 // pred_fallthru
      _
    // Predicated region
    $region14: #{forward.1} parent=1 // pred_check
      _
    $region15: #{forward.1} parent=1 // pred_check_branch
      %29 = sbr.rel (0) target = $region17
    $region16: #{forward.1} parent=1 // pred_region
      %s31 = ssub.s32 1024, 1024
      %32 = vsyncadd [#allocation5], %s31
      %s33 = sshll.u32 [#allocation4], 4
      %s34 = int_to_ptr.vmem [resolvable:$true] %s33
      %39 = dma.hbm_to_vmem [thread:$0]  %s3, 1024, %s34, [#allocation5], 64, 64, 4
    $region17: #{forward.1} parent=1 // pred_fallthru
      _
    // Predicated region
    $region18: #{forward.1} parent=1 // pred_check
      _
    $region19: #{forward.1} parent=1 // pred_check_branch
      %41 = sbr.rel (0) target = $region21
    $region20: #{forward.1} parent=1 // pred_region
      _
    $region21: #{forward.1} parent=1 // pred_fallthru
      _
    // Predicated region
    $region22: #{forward.1} parent=1 // pred_check
      _
    $region23: #{forward.1} parent=1 // pred_check_branch
      %43 = sbr.rel (0) target = $region25
    $region24: #{forward.1} parent=1 // pred_region
      %44 = dma.done [#allocation3], 1024
    $region25: #{forward.1} parent=1 // pred_fallthru
      _
    // Predicated region
    $region26: #{forward.1} parent=1 // pred_check
      _
    $region27: #{forward.1} parent=1 // pred_check_branch
      %46 = sbr.rel (0) target = $region29
    $region28: #{forward.1} parent=1 // pred_region
      %47 = dma.done [#allocation5], 1024
    $region29: #{forward.1} parent=1 // pred_fallthru
      _
    %v49 = vld [vmem:[%s0] sm:$0xf]
    %v50 = vld [vmem:[#allocation2] sm:$0xf]
    %v51 = vld [vmem:[#allocation2 + $0x4] sm:$0xf]
    %v52 = vld [vmem:[#allocation2 + $0x8] sm:$0xf]
    %v53 = vld [vmem:[#allocation2 + $0xc] sm:$0xf]
    %v54 = vld [vmem:[#allocation2 + $0x10] sm:$0xf]
    %v55 = vld [vmem:[#allocation2 + $0x14] sm:$0xf]
    %v56 = vld [vmem:[#allocation2 + $0x18] sm:$0xf]
    %v57 = vld [vmem:[#allocation2 + $0x1c] sm:$0xf]
    %v58 = vld [vmem:[#allocation2 + $0x20] sm:$0xf]
    %v59 = vld [vmem:[#allocation2 + $0x24] sm:$0xf]
    %v60 = vld [vmem:[#allocation2 + $0x28] sm:$0xf]
    %v61 = vld [vmem:[#allocation2 + $0x2c] sm:$0xf]
    %v62 = vld [vmem:[#allocation2 + $0x30] sm:$0xf]
    %v63 = vld [vmem:[#allocation2 + $0x34] sm:$0xf]
    %v64 = vld [vmem:[#allocation2 + $0x38] sm:$0xf]
    %v65 = vld [vmem:[#allocation2 + $0x3c] sm:$0xf]
    %v66 = vld [vmem:[%s2] sm:$0x1]
    %v68 = vlaneseq
    %v69 = vshrl.u32 %v68, 7
    %v70 = vsub.s32 0, %v69
    %v71 = vrot.slane %v66, %v70
    %v89 = vunpack.c.l.b16 %v50
    %v90 = vunpack.c.l.b16 %v51
    %v91 = vunpack.c.l.b16 %v52
    %v92 = vunpack.c.l.b16 %v53
    %v93 = vunpack.c.l.b16 %v54
    %v94 = vunpack.c.l.b16 %v55
    %v95 = vunpack.c.l.b16 %v56
    %v96 = vunpack.c.l.b16 %v57
    %v97 = vunpack.c.l.b16 %v58
    %v98 = vunpack.c.l.b16 %v59
    %v99 = vunpack.c.l.b16 %v60
    %v100 = vunpack.c.l.b16 %v61
    %v101 = vunpack.c.l.b16 %v62
    %v102 = vunpack.c.l.b16 %v63
    %v103 = vunpack.c.l.b16 %v64
    %v104 = vunpack.c.l.b16 %v65
    %v105 = vpack.c.b16 %v90, %v89
    %v106 = vpack.c.b16 %v92, %v91
    %v107 = vpack.c.b16 %v94, %v93
    %v108 = vpack.c.b16 %v96, %v95
    %v109 = vpack.c.b16 %v98, %v97
    %v110 = vpack.c.b16 %v100, %v99
    %v111 = vpack.c.b16 %v102, %v101
    %v112 = vpack.c.b16 %v104, %v103
    %121 = vmatprep.subr.bf16.mxu0 0
    %122 = vmatpush1.bf16.msra.mxu0 %v105
    %123 = vmatprep.subr.bf16.mxu0 0
    %124 = vmatpush1.bf16.msra.mxu0 %v106
    %125 = vmatprep.subr.bf16.mxu0 0
    %126 = vmatpush1.bf16.msra.mxu0 %v107
    %127 = vmatprep.subr.bf16.mxu0 0
    %128 = vmatpush1.bf16.msra.mxu0 %v108
    %129 = vmatprep.subr.bf16.mxu0 0
    %130 = vmatpush1.bf16.msra.mxu0 %v109
    %131 = vmatprep.subr.bf16.mxu0 0
    %132 = vmatpush1.bf16.msra.mxu0 %v110
    %133 = vmatprep.subr.bf16.mxu0 0
    %134 = vmatpush1.bf16.msra.mxu0 %v111
    %135 = vmatprep.subr.bf16.mxu0 0
    %136 = vmatpush1.bf16.msra.mxu0 %v112
    %137 = vmatprep.subr.bf16.mxu0 0
    %138 = vmatpush1.bf16.msra.mxu0 0
    %139 = vmatprep.subr.bf16.mxu0 0
    %140 = vmatpush1.bf16.msra.mxu0 0
    %141 = vmatprep.subr.bf16.mxu0 0
    %142 = vmatpush1.bf16.msra.mxu0 0
    %143 = vmatprep.subr.bf16.mxu0 0
    %144 = vmatpush1.bf16.msra.mxu0 0
    %145 = vmatprep.subr.bf16.mxu0 0
    %146 = vmatpush1.bf16.msra.mxu0 0
    %147 = vmatprep.subr.bf16.mxu0 0
    %148 = vmatpush1.bf16.msra.mxu0 0
    %149 = vmatprep.subr.bf16.mxu0 0
    %150 = vmatpush1.bf16.msra.mxu0 0
    %151 = vmatprep.subr.bf16.mxu0 0
    %152 = vmatpush1.bf16.msra.mxu0 0
    %153 = vmatprep.mubr.bf16.mxu0 0
    %154 = vmatmul.mubr.bf16.gmra.mrb[0].mxu0 %v49
    %v155 = vpop.f32.mrb[0].mxu0
    %v156 = vadd.f32 %v71, %v155
    %v157 = vpop.f32.mrb[0].mxu0
    %v158 = vpop.f32.mrb[0].mxu0
    %v159 = vpop.f32.mrb[0].mxu0
    %160 = vdwg.mxu0
    %v161 = vmax.f32 %v156, 0.0
    %v162 = vpack.c.bf16 %v161, %v161
    %v163 = vld [vmem:[#allocation4] sm:$0xf]
    %v164 = vld [vmem:[#allocation4 + $0x4] sm:$0xf]
    %v165 = vld [vmem:[#allocation4 + $0x8] sm:$0xf]
    %v166 = vld [vmem:[#allocation4 + $0xc] sm:$0xf]
    %v167 = vld [vmem:[#allocation4 + $0x10] sm:$0xf]
    %v168 = vld [vmem:[#allocation4 + $0x14] sm:$0xf]
    %v169 = vld [vmem:[#allocation4 + $0x18] sm:$0xf]
    %v170 = vld [vmem:[#allocation4 + $0x1c] sm:$0xf]
    %v171 = vld [vmem:[#allocation4 + $0x20] sm:$0xf]
    %v172 = vld [vmem:[#allocation4 + $0x24] sm:$0xf]
    %v173 = vld [vmem:[#allocation4 + $0x28] sm:$0xf]
    %v174 = vld [vmem:[#allocation4 + $0x2c] sm:$0xf]
    %v175 = vld [vmem:[#allocation4 + $0x30] sm:$0xf]
    %v176 = vld [vmem:[#allocation4 + $0x34] sm:$0xf]
    %v177 = vld [vmem:[#allocation4 + $0x38] sm:$0xf]
    %v178 = vld [vmem:[#allocation4 + $0x3c] sm:$0xf]
    %v179 = vld [vmem:[%s4] sm:$0x1]
    %v181 = vlaneseq
    %v182 = vshrl.u32 %v181, 7
    %v183 = vsub.s32 0, %v182
    %v184 = vrot.slane %v179, %v183
    %v202 = vunpack.c.l.b16 %v163
    %v203 = vunpack.c.l.b16 %v164
    %v204 = vunpack.c.l.b16 %v165
    %v205 = vunpack.c.l.b16 %v166
    %v206 = vunpack.c.l.b16 %v167
    %v207 = vunpack.c.l.b16 %v168
    %v208 = vunpack.c.l.b16 %v169
    %v209 = vunpack.c.l.b16 %v170
    %v210 = vunpack.c.l.b16 %v171
    %v211 = vunpack.c.l.b16 %v172
    %v212 = vunpack.c.l.b16 %v173
    %v213 = vunpack.c.l.b16 %v174
    %v214 = vunpack.c.l.b16 %v175
    %v215 = vunpack.c.l.b16 %v176
    %v216 = vunpack.c.l.b16 %v177
    %v217 = vunpack.c.l.b16 %v178
    %v218 = vpack.c.b16 %v203, %v202
    %v219 = vpack.c.b16 %v205, %v204
    %v220 = vpack.c.b16 %v207, %v206
    %v221 = vpack.c.b16 %v209, %v208
    %v222 = vpack.c.b16 %v211, %v210
    %v223 = vpack.c.b16 %v213, %v212
    %v224 = vpack.c.b16 %v215, %v214
    %v225 = vpack.c.b16 %v217, %v216
    %234 = vmatprep.subr.bf16.mxu0 0
    %235 = vmatpush1.bf16.msra.mxu0 %v218
    %236 = vmatprep.subr.bf16.mxu0 0
    %237 = vmatpush1.bf16.msra.mxu0 %v219
    %238 = vmatprep.subr.bf16.mxu0 0
    %239 = vmatpush1.bf16.msra.mxu0 %v220
    %240 = vmatprep.subr.bf16.mxu0 0
    %241 = vmatpush1.bf16.msra.mxu0 %v221
    %242 = vmatprep.subr.bf16.mxu0 0
    %243 = vmatpush1.bf16.msra.mxu0 %v222
    %244 = vmatprep.subr.bf16.mxu0 0
    %245 = vmatpush1.bf16.msra.mxu0 %v223
    %246 = vmatprep.subr.bf16.mxu0 0
    %247 = vmatpush1.bf16.msra.mxu0 %v224
    %248 = vmatprep.subr.bf16.mxu0 0
    %249 = vmatpush1.bf16.msra.mxu0 %v225
    %250 = vmatprep.subr.bf16.mxu0 0
    %251 = vmatpush1.bf16.msra.mxu0 0
    %252 = vmatprep.subr.bf16.mxu0 0
    %253 = vmatpush1.bf16.msra.mxu0 0
    %254 = vmatprep.subr.bf16.mxu0 0
    %255 = vmatpush1.bf16.msra.mxu0 0
    %256 = vmatprep.subr.bf16.mxu0 0
    %257 = vmatpush1.bf16.msra.mxu0 0
    %258 = vmatprep.subr.bf16.mxu0 0
    %259 = vmatpush1.bf16.msra.mxu0 0
    %260 = vmatprep.subr.bf16.mxu0 0
    %261 = vmatpush1.bf16.msra.mxu0 0
    %262 = vmatprep.subr.bf16.mxu0 0
    %263 = vmatpush1.bf16.msra.mxu0 0
    %264 = vmatprep.subr.bf16.mxu0 0
    %265 = vmatpush1.bf16.msra.mxu0 0
    %266 = vmatprep.mubr.bf16.mxu0 0
    %267 = vmatmul.mubr.bf16.gmra.mrb[0].mxu0 %v162
    %v268 = vpop.f32.mrb[0].mxu0
    %v269 = vadd.f32 %v184, %v268
    %v270 = vpop.f32.mrb[0].mxu0
    %v271 = vpop.f32.mrb[0].mxu0
    %v272 = vpop.f32.mrb[0].mxu0
    %273 = vdwg.mxu0
    %274 = vst [vmem:[%s5] sm:$0xff] %v269
    // Predicated region
    $region30: #{forward.1} parent=1 // pred_check
      _
    $region31: #{forward.1} parent=1 // pred_check_branch
      %276 = sbr.rel (0) target = $region33
    $region32: #{forward.1} parent=1 // pred_region
      _
    $region33: #{forward.1} parent=1 // pred_fallthru
      _
    // Predicated region
    $region34: #{forward.1} parent=1 // pred_check
      _
    $region35: #{forward.1} parent=1 // pred_check_branch
      %278 = sbr.rel (0) target = $region37
    $region36: #{forward.1} parent=1 // pred_region
      _
    $region37: #{forward.1} parent=1 // pred_fallthru
      _
    %279 = vsyncpa [#allocation3], 1
    %280 = vsyncpa [#allocation5], 1

</llo_original>
